<compile_context>
chip_gen: v6e
topology: v6e:2x2x1
jax: 0.10.0
libtpu: 0.0.40
codegen_flags: <defaults>
</compile_context>

<pallas_src>
import jax
import jax.numpy as jnp
from jax.experimental import pallas as pl
from jax.experimental.pallas import tpu as pltpu


def _patch_embed_kernel(x_ref, w_ref, b_ref, o_ref):
    # x_ref: (TM, K) patch rows, w_ref: (K, E), b_ref: (1, E), o_ref: (TM, E)
    acc = jnp.dot(x_ref[...], w_ref[...], preferred_element_type=jnp.float32)
    acc = acc + b_ref[...].astype(jnp.float32)
    o_ref[...] = acc.astype(o_ref.dtype)


def _round_up(x, m):
    return ((x + m - 1) // m) * m


def patch_embed_pallas(x, w, b, *, tubelet_size, patch_size, tm=256):
    """x: (B, C, T, H, W); w: (E, C, ts, ph, pw) Conv3d weight; b: (E,).

    Returns (B, num_patches, E), matching proj(x).flatten(2).transpose(1, 2).
    """
    B, C, T, H, W = x.shape
    ts = int(tubelet_size)
    ph, pw = patch_size
    E = w.shape[0]
    assert w.shape == (E, C, ts, ph, pw)
    assert T % ts == 0 and H % ph == 0 and W % pw == 0
    Tp, Hp, Wp = T // ts, H // ph, W // pw
    K = C * ts * ph * pw
    M = B * Tp * Hp * Wp

    # Patchify (layout plumbing, done by XLA outside the kernel):
    #   rows ordered (b, t', h', w'), columns ordered (c, kt, kh, kw)
    # which matches Conv3d weight flattening w.reshape(E, -1).
    xp = x.reshape(B, C, Tp, ts, Hp, ph, Wp, pw)
    xp = xp.transpose(0, 2, 4, 6, 1, 3, 5, 7)
    x2 = xp.reshape(M, K)

    w2 = w.reshape(E, K).T          # (K, E)
    b2 = b.reshape(1, E)

    # Fixed row tile; multiple of 16 so it is sublane-valid for f32 and bf16.
    tm_eff = min(tm, _round_up(M, 16))
    M_pad = _round_up(M, tm_eff)
    if M_pad != M:
        x2 = jnp.pad(x2, ((0, M_pad - M), (0, 0)))
    grid = (M_pad // tm_eff,)

    itemsize = jnp.dtype(x.dtype).itemsize
    cost = pl.CostEstimate(
        flops=2 * M_pad * K * E,
        transcendentals=0,
        bytes_accessed=(M_pad * K + K * E + E + M_pad * E) * itemsize,
    )

    out = pl.pallas_call(
        _patch_embed_kernel,
        out_shape=jax.ShapeDtypeStruct((M_pad, E), x.dtype),
        grid_spec=pltpu.PrefetchScalarGridSpec(
            num_scalar_prefetch=0,
            grid=grid,
            in_specs=[
                # streamed activations: double-buffered by default
                pl.BlockSpec((tm_eff, K), lambda i: (i, 0)),
                # weights / bias: constant index_map -> single-buffer (VMEM saver)
                pl.BlockSpec((K, E), lambda i: (0, 0), pipeline_mode=pl.Buffered(1)),
                pl.BlockSpec((1, E), lambda i: (0, 0), pipeline_mode=pl.Buffered(1)),
            ],
            out_specs=pl.BlockSpec((tm_eff, E), lambda i: (i, 0)),
        ),
        compiler_params=pltpu.CompilerParams(
            dimension_semantics=("parallel",),
            vmem_limit_bytes=48 << 20,
        ),
        cost_estimate=cost,
    )(x2, w2, b2)

    out = out[:M]
    return out.reshape(B, Tp * Hp * Wp, E)


def patch_embed_ref(x, w, b, *, tubelet_size, patch_size):
    """Pure-JAX f32 reference (same math as Conv3d with kernel == stride)."""
    B, C, T, H, W = x.shape
    ts = int(tubelet_size)
    ph, pw = patch_size
    E = w.shape[0]
    Tp, Hp, Wp = T // ts, H // ph, W // pw
    xp = x.reshape(B, C, Tp, ts, Hp, ph, Wp, pw).transpose(0, 2, 4, 6, 1, 3, 5, 7)
    x2 = xp.reshape(B * Tp * Hp * Wp, -1).astype(jnp.float32)
    w2 = w.reshape(E, -1).T.astype(jnp.float32)
    out = x2 @ w2 + b.astype(jnp.float32)[None, :]
    return out.reshape(B, Tp * Hp * Wp, E)


if __name__ == "__main__":
    # Small, module-consistent config: img 16x16, patch 8, 4 frames, tubelet 2,
    # 3 input channels, embed_dim 128 (lane-dense). K = 3*2*8*8 = 384.
    B, C, T, Hh, Ww = 2, 3, 4, 16, 16
    ts, ph, pw = 2, 8, 8
    E = 128

    key = jax.random.PRNGKey(0)
    kx, kw, kb = jax.random.split(key, 3)
    x = jax.random.normal(kx, (B, C, T, Hh, Ww), jnp.float32).astype(jnp.bfloat16)
    w = (jax.random.normal(kw, (E, C, ts, ph, pw), jnp.float32) * 0.02).astype(jnp.bfloat16)
    b = (jax.random.normal(kb, (E,), jnp.float32) * 0.02).astype(jnp.bfloat16)

    y = patch_embed_pallas(x, w, b, tubelet_size=ts, patch_size=(ph, pw))
    y = jax.block_until_ready(y)

    y_ref = patch_embed_ref(x, w, b, tubelet_size=ts, patch_size=(ph, pw))
    num_patches = (T // ts) * (Hh // ph) * (Ww // pw)
    assert y.shape == (B, num_patches, E)
    assert jnp.allclose(y.astype(jnp.float32), y_ref, atol=2e-2, rtol=2e-2), \
        "mismatch vs reference"

    print("KERNEL_OK")
</pallas_src>

<mosaic_0001>
module attributes {stable_mosaic.version = 11 : i64} {
  func.func @_patch_embed_kernel(%arg0: i32, %arg1: memref<16x384xbf16, #tpu.memory_space<vmem>>, %arg2: memref<384x128xbf16, #tpu.memory_space<vmem>>, %arg3: memref<1x128xbf16, #tpu.memory_space<vmem>>, %arg4: memref<16x128xbf16, #tpu.memory_space<vmem>>) attributes {dimension_semantics = [#tpu.dimension_semantics<parallel>], iteration_bounds = array<i64: 1>, scalar_prefetch = 0 : i64, scratch_operands = 0 : i64, tpu.core_type = #tpu.core_type<tc>, window_params = [{transform_indices = @transform_0, window_bounds = array<i64: 16, 384>}, {pipeline_mode = #tpu.pipeline_mode<synchronous>, transform_indices = @transform_1, window_bounds = array<i64: 384, 128>}, {pipeline_mode = #tpu.pipeline_mode<synchronous>, transform_indices = @transform_2, window_bounds = array<i64: 1, 128>}, {transform_indices = @transform_3, window_bounds = array<i64: 16, 128>}]} {
    %c0 = arith.constant 0 : index
    %c0_0 = arith.constant 0 : index
    %0 = vector.load %arg1[%c0, %c0_0] : memref<16x384xbf16, #tpu.memory_space<vmem>>, vector<16x384xbf16>
    %c0_1 = arith.constant 0 : index
    %c0_2 = arith.constant 0 : index
    %1 = vector.load %arg2[%c0_1, %c0_2] : memref<384x128xbf16, #tpu.memory_space<vmem>>, vector<384x128xbf16>
    %cst = arith.constant dense<0.000000e+00> : vector<16x128xf32>
    %2 = tpu.matmul %0, %1, %cst {dimension_numbers = #tpu.dot_dimension_numbers<[1], [0], [0], [1], [0, 0, 1, 1], [], []>} : vector<16x384xbf16>, vector<384x128xbf16>, vector<16x128xf32> -> vector<16x128xf32>
    %c0_3 = arith.constant 0 : index
    %c0_4 = arith.constant 0 : index
    %3 = vector.load %arg3[%c0_3, %c0_4] : memref<1x128xbf16, #tpu.memory_space<vmem>>, vector<1x128xbf16>
    %4 = arith.extf %3 : vector<1x128xbf16> to vector<1x128xf32>
    %5 = vector.broadcast %4 : vector<1x128xf32> to vector<16x128xf32>
    %6 = arith.addf %2, %5 : vector<16x128xf32>
    %7 = arith.truncf %6 : vector<16x128xf32> to vector<16x128xbf16>
    %c0_5 = arith.constant 0 : index
    %c0_6 = arith.constant 0 : index
    %8 = vector.load %arg4[%c0_5, %c0_6] : memref<16x128xbf16, #tpu.memory_space<vmem>>, vector<16x128xbf16>
    tpu.vector_store %arg4[%c0_5, %c0_6], %7 {strides = array<i32>} : memref<16x128xbf16, #tpu.memory_space<vmem>>, vector<16x128xbf16>,
    return
  }
  func.func @transform_0(%arg0: i32) -> (i32, i32) {
    %c0_i32 = arith.constant 0 : i32
    %c0_i32_0 = arith.constant 0 : i32
    return %arg0, %c0_i32 : i32, i32
  }
  func.func @transform_1(%arg0: i32) -> (i32, i32) {
    %c0_i32 = arith.constant 0 : i32
    %c0_i32_0 = arith.constant 0 : i32
    %c0_i32_1 = arith.constant 0 : i32
    return %c0_i32, %c0_i32_0 : i32, i32
  }
  func.func @transform_2(%arg0: i32) -> (i32, i32) {
    %c0_i32 = arith.constant 0 : i32
    %c0_i32_0 = arith.constant 0 : i32
    %c0_i32_1 = arith.constant 0 : i32
    return %c0_i32, %c0_i32_0 : i32, i32
  }
  func.func @transform_3(%arg0: i32) -> (i32, i32) {
    %c0_i32 = arith.constant 0 : i32
    %c0_i32_0 = arith.constant 0 : i32
    return %arg0, %c0_i32 : i32, i32
  }
}

</mosaic_0001>

<llo_original>
// kernel: tpu_custom_call.1
$region0: #{tpu_custom_call.1}
  #allocation0 [shape = 'u32[]', space=smem, size = 0x4, offset = 0x4, fixed_abs, tag = 'smem constant byte address 0x4 - core index']
  #allocation1 [shape = 'u32[144,128]{1,0:T(1,128)}', space=vmem, size = 0x12000, scoped, tag = 'internal scratch']
  %s0 = inlined_call_operand.hbm [shape: bf16[16,384], index: 0, kind: input, shape index: {}]
  %s1 = inlined_call_operand.hbm [shape: bf16[384,128], index: 1, kind: input, shape index: {}]
  %s2 = inlined_call_operand.vmem [shape: bf16[1,128], index: 2, kind: input, shape index: {}]
  %s3 = inlined_call_operand.hbm [shape: bf16[16,128], index: 3, kind: output, shape index: {}]
  %s4 = sld [smem:[#allocation0]]
  $region30: #{tpu_custom_call.1} parent=0
    _
  %s6 = ssub.s32 1, %s4
  %s7 = scalar_select 0, %s6, %s4
  $region1: #{tpu_custom_call.1} parent=0
    #allocation2 [shape = 'u8[12288]{0}', space=vmem, size = 0x3000, scoped, tag = 'input window, operand 0, single buffered']
    #allocation3 [shape = 's32[1]{0}', space=sflag, size = 0x4, scoped, tag = 'scoped memory for tpu_custom_call.1']
    #allocation4 [shape = 's32[1]{0}', space=sflag, size = 0x4, scoped, tag = 'scoped memory for tpu_custom_call.1']
    #allocation5 [shape = 'u8[98304]{0}', space=vmem, size = 0x18000, scoped, tag = 'input window, operand 1, single buffered']
    #allocation6 [shape = 's32[1]{0}', space=sflag, size = 0x4, scoped, tag = 'scoped memory for tpu_custom_call.1']
    #allocation7 [shape = 'u8[4096]{0}', space=vmem, size = 0x1000, scoped, tag = 'output window, operand 0, single buffered']
    %8 = vsyncpa [#allocation3], 0
    %9 = vsyncpa [#allocation6], 0
    %10 = vsyncpa [#allocation4], 0
    // Predicated region
    $region2: #{tpu_custom_call.1} parent=1 // pred_check
      _
    $region3: #{tpu_custom_call.1} parent=1 // pred_check_branch
      %12 = sbr.rel (0) target = $region5
    $region4: #{tpu_custom_call.1} parent=1 // pred_region
      %s14 = ssub.s32 384, 384
      %15 = vsyncadd [#allocation3], %s14
      %s16 = sshll.u32 [#allocation2], 4
      %s17 = int_to_ptr.vmem [resolvable:$true] %s16
      %22 = dma.hbm_to_vmem [thread:$0]  %s0, 384, %s17, [#allocation3], 192, 192, 12
    $region5: #{tpu_custom_call.1} parent=1 // pred_fallthru
      _
    // Predicated region
    $region6: #{tpu_custom_call.1} parent=1 // pred_check
      _
    $region7: #{tpu_custom_call.1} parent=1 // pred_check_branch
      %24 = sbr.rel (0) target = $region9
    $region8: #{tpu_custom_call.1} parent=1 // pred_region
      %s26 = ssub.s32 3072, 3072
      %27 = vsyncadd [#allocation6], %s26
      %s28 = sshll.u32 [#allocation5], 4
      %s29 = int_to_ptr.vmem [resolvable:$true] %s28
      %34 = dma.hbm_to_vmem [thread:$0]  %s1, 3072, %s29, [#allocation6], 64, 64, 4
    $region9: #{tpu_custom_call.1} parent=1 // pred_fallthru
      _
    // Predicated region
    $region10: #{tpu_custom_call.1} parent=1 // pred_check
      _
    $region11: #{tpu_custom_call.1} parent=1 // pred_check_branch
      %36 = sbr.rel (0) target = $region13
    $region12: #{tpu_custom_call.1} parent=1 // pred_region
      _
    $region13: #{tpu_custom_call.1} parent=1 // pred_fallthru
      _
    // Predicated region
    $region14: #{tpu_custom_call.1} parent=1 // pred_check
      _
    $region15: #{tpu_custom_call.1} parent=1 // pred_check_branch
      %38 = sbr.rel (0) target = $region17
    $region16: #{tpu_custom_call.1} parent=1 // pred_region
      %39 = dma.done [#allocation3], 384
    $region17: #{tpu_custom_call.1} parent=1 // pred_fallthru
      _
    // Predicated region
    $region18: #{tpu_custom_call.1} parent=1 // pred_check
      _
    $region19: #{tpu_custom_call.1} parent=1 // pred_check_branch
      %41 = sbr.rel (0) target = $region21
    $region20: #{tpu_custom_call.1} parent=1 // pred_region
      %42 = dma.done [#allocation6], 3072
    $region21: #{tpu_custom_call.1} parent=1 // pred_fallthru
      _
    %v44 = vld [vmem:[#allocation2] sm:$0xff]
    %v45 = vld [vmem:[#allocation2 + $0x8] sm:$0xf]
    %v46 = vld [vmem:[#allocation2 + $0xc] sm:$0xff]
    %v47 = vld [vmem:[#allocation2 + $0x14] sm:$0xf]
    %v48 = vld [vmem:[#allocation5] sm:$0xf]
    %v49 = vld [vmem:[#allocation5 + $0x4] sm:$0xf]
    %v50 = vld [vmem:[#allocation5 + $0x8] sm:$0xf]
    %v51 = vld [vmem:[#allocation5 + $0xc] sm:$0xf]
    %v52 = vld [vmem:[#allocation5 + $0x10] sm:$0xf]
    %v53 = vld [vmem:[#allocation5 + $0x14] sm:$0xf]
    %v54 = vld [vmem:[#allocation5 + $0x18] sm:$0xf]
    %v55 = vld [vmem:[#allocation5 + $0x1c] sm:$0xf]
    %v56 = vld [vmem:[#allocation5 + $0x20] sm:$0xf]
    %v57 = vld [vmem:[#allocation5 + $0x24] sm:$0xf]
    %v58 = vld [vmem:[#allocation5 + $0x28] sm:$0xf]
    %v59 = vld [vmem:[#allocation5 + $0x2c] sm:$0xf]
    %v60 = vld [vmem:[#allocation5 + $0x30] sm:$0xf]
    %v61 = vld [vmem:[#allocation5 + $0x34] sm:$0xf]
    %v62 = vld [vmem:[#allocation5 + $0x38] sm:$0xf]
    %v63 = vld [vmem:[#allocation5 + $0x3c] sm:$0xf]
    %v64 = vld [vmem:[#allocation5 + $0x40] sm:$0xf]
    %v65 = vld [vmem:[#allocation5 + $0x44] sm:$0xf]
    %v66 = vld [vmem:[#allocation5 + $0x48] sm:$0xf]
    %v67 = vld [vmem:[#allocation5 + $0x4c] sm:$0xf]
    %v68 = vld [vmem:[#allocation5 + $0x50] sm:$0xf]
    %v69 = vld [vmem:[#allocation5 + $0x54] sm:$0xf]
    %v70 = vld [vmem:[#allocation5 + $0x58] sm:$0xf]
    %v71 = vld [vmem:[#allocation5 + $0x5c] sm:$0xf]
    %v72 = vld [vmem:[#allocation5 + $0x60] sm:$0xf]
    %v73 = vld [vmem:[#allocation5 + $0x64] sm:$0xf]
    %v74 = vld [vmem:[#allocation5 + $0x68] sm:$0xf]
    %v75 = vld [vmem:[#allocation5 + $0x6c] sm:$0xf]
    %v76 = vld [vmem:[#allocation5 + $0x70] sm:$0xf]
    %v77 = vld [vmem:[#allocation5 + $0x74] sm:$0xf]
    %v78 = vld [vmem:[#allocation5 + $0x78] sm:$0xf]
    %v79 = vld [vmem:[#allocation5 + $0x7c] sm:$0xf]
    %v80 = vld [vmem:[#allocation5 + $0x80] sm:$0xf]
    %v81 = vld [vmem:[#allocation5 + $0x84] sm:$0xf]
    %v82 = vld [vmem:[#allocation5 + $0x88] sm:$0xf]
    %v83 = vld [vmem:[#allocation5 + $0x8c] sm:$0xf]
    %v84 = vld [vmem:[#allocation5 + $0x90] sm:$0xf]
    %v85 = vld [vmem:[#allocation5 + $0x94] sm:$0xf]
    %v86 = vld [vmem:[#allocation5 + $0x98] sm:$0xf]
    %v87 = vld [vmem:[#allocation5 + $0x9c] sm:$0xf]
    %v88 = vld [vmem:[#allocation5 + $0xa0] sm:$0xf]
    %v89 = vld [vmem:[#allocation5 + $0xa4] sm:$0xf]
    %v90 = vld [vmem:[#allocation5 + $0xa8] sm:$0xf]
    %v91 = vld [vmem:[#allocation5 + $0xac] sm:$0xf]
    %v92 = vld [vmem:[#allocation5 + $0xb0] sm:$0xf]
    %v93 = vld [vmem:[#allocation5 + $0xb4] sm:$0xf]
    %v94 = vld [vmem:[#allocation5 + $0xb8] sm:$0xf]
    %v95 = vld [vmem:[#allocation5 + $0xbc] sm:$0xf]
    %v96 = vld [vmem:[%s2] sm:$0x1]
    %v97 = vunpack.c.l.bf16 %v96
    %v98 = vlaneseq
    %v99 = vshrl.u32 %v98, 7
    %v100 = vsub.s32 0, %v99
    %v101 = vrot.slane %v97, %v100
    %v106 = vunpack.c.l.b16 %v44
    %v107 = vunpack.c.h.b16 %v44
    %v108 = vunpack.c.l.b16 %v45
    %v109 = vunpack.c.l.b16 %v46
    %v110 = vunpack.c.h.b16 %v46
    %v111 = vunpack.c.l.b16 %v47
    %v112 = vpack.c.b16 %v109, %v106
    %v113 = vpack.c.b16 %v110, %v107
    %v114 = vpack.c.b16 %v111, %v108
    %v166 = vunpack.c.l.b16 %v48
    %v167 = vunpack.c.l.b16 %v49
    %v168 = vunpack.c.l.b16 %v50
    %v169 = vunpack.c.l.b16 %v51
    %v170 = vunpack.c.l.b16 %v52
    %v171 = vunpack.c.l.b16 %v53
    %v172 = vunpack.c.l.b16 %v54
    %v173 = vunpack.c.l.b16 %v55
    %v174 = vunpack.c.l.b16 %v56
    %v175 = vunpack.c.l.b16 %v57
    %v176 = vunpack.c.l.b16 %v58
    %v177 = vunpack.c.l.b16 %v59
    %v178 = vunpack.c.l.b16 %v60
    %v179 = vunpack.c.l.b16 %v61
    %v180 = vunpack.c.l.b16 %v62
    %v181 = vunpack.c.l.b16 %v63
    %v182 = vunpack.c.l.b16 %v64
    %v183 = vunpack.c.l.b16 %v65
    %v184 = vunpack.c.l.b16 %v66
    %v185 = vunpack.c.l.b16 %v67
    %v186 = vunpack.c.l.b16 %v68
    %v187 = vunpack.c.l.b16 %v69
    %v188 = vunpack.c.l.b16 %v70
    %v189 = vunpack.c.l.b16 %v71
    %v190 = vunpack.c.l.b16 %v72
    %v191 = vunpack.c.l.b16 %v73
    %v192 = vunpack.c.l.b16 %v74
    %v193 = vunpack.c.l.b16 %v75
    %v194 = vunpack.c.l.b16 %v76
    %v195 = vunpack.c.l.b16 %v77
    %v196 = vunpack.c.l.b16 %v78
    %v197 = vunpack.c.l.b16 %v79
    %v198 = vunpack.c.l.b16 %v80
    %v199 = vunpack.c.l.b16 %v81
    %v200 = vunpack.c.l.b16 %v82
    %v201 = vunpack.c.l.b16 %v83
    %v202 = vunpack.c.l.b16 %v84
    %v203 = vunpack.c.l.b16 %v85
    %v204 = vunpack.c.l.b16 %v86
    %v205 = vunpack.c.l.b16 %v87
    %v206 = vunpack.c.l.b16 %v88
    %v207 = vunpack.c.l.b16 %v89
    %v208 = vunpack.c.l.b16 %v90
    %v209 = vunpack.c.l.b16 %v91
    %v210 = vunpack.c.l.b16 %v92
    %v211 = vunpack.c.l.b16 %v93
    %v212 = vunpack.c.l.b16 %v94
    %v213 = vunpack.c.l.b16 %v95
    %v214 = vpack.c.b16 %v167, %v166
    %v215 = vpack.c.b16 %v169, %v168
    %v216 = vpack.c.b16 %v171, %v170
    %v217 = vpack.c.b16 %v173, %v172
    %v218 = vpack.c.b16 %v175, %v174
    %v219 = vpack.c.b16 %v177, %v176
    %v220 = vpack.c.b16 %v179, %v178
    %v221 = vpack.c.b16 %v181, %v180
    %v222 = vpack.c.b16 %v183, %v182
    %v223 = vpack.c.b16 %v185, %v184
    %v224 = vpack.c.b16 %v187, %v186
    %v225 = vpack.c.b16 %v189, %v188
    %v226 = vpack.c.b16 %v191, %v190
    %v227 = vpack.c.b16 %v193, %v192
    %v228 = vpack.c.b16 %v195, %v194
    %v229 = vpack.c.b16 %v197, %v196
    %v230 = vpack.c.b16 %v199, %v198
    %v231 = vpack.c.b16 %v201, %v200
    %v232 = vpack.c.b16 %v203, %v202
    %v233 = vpack.c.b16 %v205, %v204
    %v234 = vpack.c.b16 %v207, %v206
    %v235 = vpack.c.b16 %v209, %v208
    %v236 = vpack.c.b16 %v211, %v210
    %v237 = vpack.c.b16 %v213, %v212
    %262 = vmatprep.subr.bf16.mxu0 0
    %263 = vmatpush1.bf16.msra.mxu0 %v221
    %264 = vmatprep.subr.bf16.mxu0 0
    %265 = vmatpush1.bf16.msra.mxu0 %v220
    %266 = vmatprep.subr.bf16.mxu0 0
    %267 = vmatpush1.bf16.msra.mxu0 %v219
    %268 = vmatprep.subr.bf16.mxu0 0
    %269 = vmatpush1.bf16.msra.mxu0 %v218
    %270 = vmatprep.subr.bf16.mxu0 0
    %271 = vmatpush1.bf16.msra.mxu0 %v217
    %272 = vmatprep.subr.bf16.mxu0 0
    %273 = vmatpush1.bf16.msra.mxu0 %v216
    %274 = vmatprep.subr.bf16.mxu0 0
    %275 = vmatpush1.bf16.msra.mxu0 %v215
    %276 = vmatprep.subr.bf16.mxu0 0
    %277 = vmatpush1.bf16.msra.mxu0 %v214
    %278 = vmatprep.subr.bf16.mxu0 0
    %279 = vmatpush2.bf16.msra.mxu0 %v229
    %280 = vmatprep.subr.bf16.mxu0 0
    %281 = vmatpush2.bf16.msra.mxu0 %v228
    %282 = vmatprep.subr.bf16.mxu0 0
    %283 = vmatpush2.bf16.msra.mxu0 %v227
    %284 = vmatprep.subr.bf16.mxu0 0
    %285 = vmatpush2.bf16.msra.mxu0 %v226
    %286 = vmatprep.subr.bf16.mxu0 0
    %287 = vmatpush2.bf16.msra.mxu0 %v225
    %288 = vmatprep.subr.bf16.mxu0 0
    %289 = vmatpush2.bf16.msra.mxu0 %v224
    %290 = vmatprep.subr.bf16.mxu0 0
    %291 = vmatpush2.bf16.msra.mxu0 %v223
    %292 = vmatprep.subr.bf16.mxu0 0
    %293 = vmatpush2.bf16.msra.mxu0 %v222
    %294 = vmatprep.mubr.bf16.mxu0 %v113
    %295 = vmatmul.mubr.bf16.gmra.mxu0 %v112
    %v296 = vpop.f32.mrf.mxu0
    %v297 = vadd.f32 %v101, %v296
    %v298 = vpop.f32.mrf.mxu0
    %v299 = vpop.f32.mrf.mxu0
    %v300 = vadd.f32 %v101, %v299
    %v301 = vpop.f32.mrf.mxu0
    %302 = vdwg.mxu0
    %303 = vmatprep.subr.bf16.mxu0 0
    %304 = vmatpush1.bf16.msra.mxu0 %v237
    %305 = vmatprep.subr.bf16.mxu0 0
    %306 = vmatpush1.bf16.msra.mxu0 %v236
    %307 = vmatprep.subr.bf16.mxu0 0
    %308 = vmatpush1.bf16.msra.mxu0 %v235
    %309 = vmatprep.subr.bf16.mxu0 0
    %310 = vmatpush1.bf16.msra.mxu0 %v234
    %311 = vmatprep.subr.bf16.mxu0 0
    %312 = vmatpush1.bf16.msra.mxu0 %v233
    %313 = vmatprep.subr.bf16.mxu0 0
    %314 = vmatpush1.bf16.msra.mxu0 %v232
    %315 = vmatprep.subr.bf16.mxu0 0
    %316 = vmatpush1.bf16.msra.mxu0 %v231
    %317 = vmatprep.subr.bf16.mxu0 0
    %318 = vmatpush1.bf16.msra.mxu0 %v230
    %319 = vmatprep.subr.bf16.mxu0 0
    %320 = vmatpush2.bf16.msra.mxu0 0
    %321 = vmatprep.subr.bf16.mxu0 0
    %322 = vmatpush2.bf16.msra.mxu0 0
    %323 = vmatprep.subr.bf16.mxu0 0
    %324 = vmatpush2.bf16.msra.mxu0 0
    %325 = vmatprep.subr.bf16.mxu0 0
    %326 = vmatpush2.bf16.msra.mxu0 0
    %327 = vmatprep.subr.bf16.mxu0 0
    %328 = vmatpush2.bf16.msra.mxu0 0
    %329 = vmatprep.subr.bf16.mxu0 0
    %330 = vmatpush2.bf16.msra.mxu0 0
    %331 = vmatprep.subr.bf16.mxu0 0
    %332 = vmatpush2.bf16.msra.mxu0 0
    %333 = vmatprep.subr.bf16.mxu0 0
    %334 = vmatpush2.bf16.msra.mxu0 0
    %335 = vmatprep.mubr.bf16.mxu0 0
    %336 = vmatmul.mubr.bf16.gmra.mxu0 %v114
    %v337 = vpop.f32.mrf.mxu0
    %v338 = vadd.f32 %v297, %v337
    %v339 = vpop.f32.mrf.mxu0
    %v340 = vpop.f32.mrf.mxu0
    %v341 = vadd.f32 %v300, %v340
    %v342 = vpop.f32.mrf.mxu0
    %343 = vdwg.mxu0
    %v344 = vpack.c.bf16 %v341, %v338
    %v346 = vunpack.c.l.b16 %v344
    %v347 = vunpack.c.h.b16 %v344
    %v348 = vpack.c.b16 %v346, %v346
    %v349 = vpack.c.b16 %v347, %v347
    %352 = vst [vmem:[#allocation7] sm:$0xf] %v348
    %353 = vst [vmem:[#allocation7 + $0x4] sm:$0xf] %v349
    // Predicated region
    $region22: #{tpu_custom_call.1} parent=1 // pred_check
      _
    $region23: #{tpu_custom_call.1} parent=1 // pred_check_branch
      %355 = sbr.rel (0) target = $region25
    $region24: #{tpu_custom_call.1} parent=1 // pred_region
      %s357 = ssub.s32 128, 128
      %358 = vsyncadd [#allocation4], %s357
      %s359 = sshll.u32 [#allocation7], 4
      %s360 = int_to_ptr.vmem [resolvable:$true] %s359
      %365 = dma.vmem_to_hbm [thread:$0]  %s360, 128, %s3, [#allocation4], 64, 64, 4
    $region25: #{tpu_custom_call.1} parent=1 // pred_fallthru
      _
    // Predicated region
    $region26: #{tpu_custom_call.1} parent=1 // pred_check
      _
    $region27: #{tpu_custom_call.1} parent=1 // pred_check_branch
      %367 = sbr.rel (0) target = $region29
    $region28: #{tpu_custom_call.1} parent=1 // pred_region
      %368 = dma.done [#allocation4], 128
    $region29: #{tpu_custom_call.1} parent=1 // pred_fallthru
      _
    %369 = vsyncpa [#allocation3], 1
    %370 = vsyncpa [#allocation6], 1
    %371 = vsyncpa [#allocation4], 1

</llo_original>
